<compile_context>
chip_gen: v6e
topology: v6e:2x2x1
jax: 0.10.0
libtpu: 0.0.40
codegen_flags: <defaults>
</compile_context>

<pallas_src>
import functools

import jax
import jax.numpy as jnp
import numpy as np
from jax import lax
from jax.experimental import pallas as pl
from jax.experimental.pallas import tpu as pltpu

_LANE = 128
_SUBLANE = 8


def _round_down(v, m):
    return (v // m) * m


def _round_up(v, m):
    return ((v + m - 1) // m) * m


@functools.lru_cache(maxsize=1)
def _device_budgets():
    """(target_block_bytes, vmem_limit_bytes) keyed on per-core VMEM size."""
    vmem_cap = 128 << 20
    try:
        info = pltpu.get_tpu_info()
        vmem_cap = int(getattr(info, "vmem_capacity_bytes", vmem_cap))
    except Exception:
        pass
    if vmem_cap <= (64 << 20):            # v7x-class: 64 MiB per TensorCore
        return 12 << 20, 48 << 20
    return 12 << 20, 64 << 20             # v5e / v6e: 128 MiB physical VMEM


def _lowest(dtype):
    dtype = jnp.dtype(dtype)
    if jnp.issubdtype(dtype, jnp.floating):
        return float("-inf")
    if jnp.issubdtype(dtype, jnp.integer):
        return int(jnp.iinfo(dtype).min)
    if dtype == jnp.bool_:
        return False
    raise ValueError(f"Unsupported dtype for max pooling: {dtype}")


# --------------------------------------------------------------------------
# Kernels
# --------------------------------------------------------------------------
def _pool_kernel_3d(x_ref, o_ref, *scratch, agg, r_total, tile_r,
                    need_mask, single_r):
    """x_ref: (TO, TR, TI); o_ref: (TO, TI); optional acc scratch (TO, TI)."""
    k = pl.program_id(2)
    last = pl.num_programs(2) - 1

    if agg == "max":
        fill = _lowest(x_ref.dtype)
        load = lambda: x_ref[...]                       # native dtype (exact)
        reduce = lambda x: jnp.max(x, axis=1)
        combine = jnp.maximum
    else:  # mean -> accumulate sum in f32
        fill = 0.0
        load = lambda: x_ref[...].astype(jnp.float32)
        reduce = lambda x: jnp.sum(x, axis=1)
        combine = lambda a, b: a + b

    def load_masked():
        x = load()
        limit = r_total - k * tile_r                    # valid rows this block
        idx = lax.broadcasted_iota(jnp.int32, x.shape[1:], 0)   # (TR, TI)
        return jnp.where(idx < limit, x, jnp.asarray(fill, x.dtype))

    def finalize(res):
        if agg == "mean":
            res = res * (1.0 / float(r_total))
        o_ref[...] = res.astype(o_ref.dtype)

    if single_r:                       # whole R in one block: no scratch
        finalize(reduce(load_masked() if need_mask else load()))
        return

    acc_ref = scratch[0]

    @pl.when(k == 0)
    def _():
        acc_ref[...] = jnp.full(acc_ref.shape, fill, acc_ref.dtype)

    def step(x):
        acc_ref[...] = combine(acc_ref[...], reduce(x))

    if need_mask:
        # Only the final R block is ragged; all other steps stay mask-free.
        @pl.when(k != last)
        def _():
            step(load())

        @pl.when(k == last)
        def _():
            step(load_masked())
    else:
        step(load())

    @pl.when(k == last)
    def _():
        finalize(acc_ref[...])


def _pool_kernel_2d(x_ref, o_ref, *scratch, agg, r_total, tile_r,
                    need_mask, single_r):
    """Last-axis reduction. x_ref: (TO, TR); o_ref: (TO, 1)."""
    k = pl.program_id(1)
    last = pl.num_programs(1) - 1

    if agg == "max":
        fill = _lowest(x_ref.dtype)
        load = lambda: x_ref[...]
        reduce = lambda x: jnp.max(x, axis=1, keepdims=True)
        combine = jnp.maximum
    else:
        fill = 0.0
        load = lambda: x_ref[...].astype(jnp.float32)
        reduce = lambda x: jnp.sum(x, axis=1, keepdims=True)
        combine = lambda a, b: a + b

    def load_masked():
        x = load()
        limit = r_total - k * tile_r
        idx = lax.broadcasted_iota(jnp.int32, (1, tile_r), 1)
        return jnp.where(idx < limit, x, jnp.asarray(fill, x.dtype))

    def finalize(res):
        if agg == "mean":
            res = res * (1.0 / float(r_total))
        o_ref[...] = res.astype(o_ref.dtype)

    if single_r:
        finalize(reduce(load_masked() if need_mask else load()))
        return

    acc_ref = scratch[0]

    @pl.when(k == 0)
    def _():
        acc_ref[...] = jnp.full(acc_ref.shape, fill, acc_ref.dtype)

    def step(x):
        acc_ref[...] = combine(acc_ref[...], reduce(x))

    if need_mask:
        @pl.when(k != last)
        def _():
            step(load())

        @pl.when(k == last)
        def _():
            step(load_masked())
    else:
        step(load())

    @pl.when(k == last)
    def _():
        finalize(acc_ref[...])


# --------------------------------------------------------------------------
# Tile selection (last two block dims must be multiples of (8, 128) or equal
# the full array extent).
# --------------------------------------------------------------------------
def _choose_tiles_3d(outer, r, inner, dtype_bytes, target_bytes, vmem_budget):
    # tile_o: output-block sublane axis -> multiple of 8 or the full extent.
    # When inner is lane-sparse (< 128), take more rows per block up front.
    base_o = 64 if inner < _LANE else _SUBLANE
    tile_o = outer if outer <= base_o else base_o

    # tile_i: lane axis -> full extent, or a multiple of 128 within budget
    # (assuming >= 8 rows of R per block).  No hard cap.
    lane_budget = max(_LANE,
                      target_bytes // max(1, tile_o * _SUBLANE * dtype_bytes))
    if inner <= lane_budget:
        tile_i = inner
    else:
        tile_i = max(_LANE, _round_down(lane_budget, _LANE))

    # tile_r: input-block sublane axis -> multiple of 8 or full extent,
    # sized so one input block is ~target_bytes.
    max_r = max(1, target_bytes // max(1, tile_o * tile_i * dtype_bytes))
    if max_r >= r:
        tile_r = r
    else:
        tile_r = min(r, max(_SUBLANE, _round_down(max_r, _SUBLANE)))

    # If the whole (R, inner) slab is small, grow tile_o to amortize the
    # per-grid-step overhead, keeping 2x in + 2x out + f32 acc inside VMEM.
    if tile_r == r and tile_i == inner and outer > tile_o:
        per_o_in = tile_r * tile_i * dtype_bytes
        per_o_all = 2 * per_o_in + 2 * tile_i * dtype_bytes + 4 * tile_i
        max_o = min(target_bytes // max(1, per_o_in),
                    int(0.75 * vmem_budget) // max(1, per_o_all))
        new_o = min(outer, max(tile_o, max_o))
        if new_o < outer:
            new_o = max(tile_o, _round_down(new_o, _SUBLANE))
        tile_o = new_o

    # v7x has 2 TensorCores: if the whole grid would have only the reduction
    # axis (> 1 step), split outer so the parallel axes get >= 2 steps.
    if tile_o == outer and tile_i == inner and outer > _SUBLANE:
        half = _round_up(-(-outer // 2), _SUBLANE)
        if half < outer:
            tile_o = half
    return tile_o, tile_r, tile_i


def _choose_tiles_2d(outer, r, dtype_bytes, target_bytes):
    # R on the lane axis: full extent or a multiple of 128 within budget.
    max_lanes = max(_LANE, target_bytes // max(1, _SUBLANE * dtype_bytes))
    tile_r = r if r <= max_lanes else _round_down(max_lanes, _LANE)
    # outer on the sublane axis: multiple of 8 or full, filling the budget.
    rows = max(1, target_bytes // max(1, tile_r * dtype_bytes))
    if rows >= outer:
        tile_o = outer
    else:
        tile_o = min(outer, max(_SUBLANE, _round_down(rows, _SUBLANE)))
    # Ensure >= 2 steps on the parallel axis when possible (v7x dual TC).
    if tile_o == outer and outer > _SUBLANE:
        half = _round_up(-(-outer // 2), _SUBLANE)
        if half < outer:
            tile_o = half
    return tile_o, tile_r


# --------------------------------------------------------------------------
# Wrapper
# --------------------------------------------------------------------------
def global_pooling(x, dim, agg="max", keepdim=False, *,
                   target_block_bytes=None, vmem_limit_bytes=None):
    """JAX/Pallas equivalent of GlobalPooling(dim, agg, keepdim).forward(x)."""
    if agg not in ("max", "mean"):
        raise ValueError(f"Unknown aggregation {agg}")

    ndim = x.ndim
    dim = dim % ndim
    r = x.shape[dim]
    if r == 0:
        raise ValueError("GlobalPooling over an empty dimension")
    if agg == "mean" and not jnp.issubdtype(x.dtype, jnp.floating):
        raise ValueError("mean pooling requires a floating-point input")

    default_target, default_vmem = _device_budgets()
    target_bytes = int(target_block_bytes or default_target)
    vmem_limit = int(vmem_limit_bytes or default_vmem)

    pre_shape = x.shape[:dim]
    post_shape = x.shape[dim + 1:]
    outer = int(np.prod(pre_shape)) if pre_shape else 1
    inner = int(np.prod(post_shape)) if post_shape else 1
    dtype_bytes = x.dtype.itemsize
    acc_dtype = x.dtype if agg == "max" else jnp.float32

    if inner == 1:
        # ------- last-axis reduction: lane-dense 2-D path -------------------
        x2 = x.reshape(outer, r)
        tile_o, tile_r = _choose_tiles_2d(outer, r, dtype_bytes, target_bytes)
        n_o = pl.cdiv(outer, tile_o)
        n_r = pl.cdiv(r, tile_r)
        single_r = (n_r == 1)
        need_mask = (not single_r) and (r % tile_r != 0)
        scratch = [] if single_r else [pltpu.VMEM((tile_o, 1), acc_dtype)]

        flat = pl.pallas_call(
            functools.partial(_pool_kernel_2d, agg=agg, r_total=r,
                              tile_r=tile_r, need_mask=need_mask,
                              single_r=single_r),
            out_shape=jax.ShapeDtypeStruct((outer, 1), x.dtype),
            grid_spec=pltpu.PrefetchScalarGridSpec(
                num_scalar_prefetch=0,
                grid=(n_o, n_r),
                in_specs=[pl.BlockSpec((tile_o, tile_r), lambda o, k: (o, k))],
                out_specs=pl.BlockSpec((tile_o, 1), lambda o, k: (o, 0)),
                scratch_shapes=scratch,
            ),
            compiler_params=pltpu.CompilerParams(
                dimension_semantics=("parallel", "arbitrary"),
                vmem_limit_bytes=vmem_limit),
        )(x2)
    else:
        # ------- general (outer, R, inner) path ------------------------------
        x3 = x.reshape(outer, r, inner)
        tile_o, tile_r, tile_i = _choose_tiles_3d(
            outer, r, inner, dtype_bytes, target_bytes, vmem_limit)
        n_o = pl.cdiv(outer, tile_o)
        n_i = pl.cdiv(inner, tile_i)
        n_r = pl.cdiv(r, tile_r)
        single_r = (n_r == 1)
        need_mask = (not single_r) and (r % tile_r != 0)
        scratch = [] if single_r else [pltpu.VMEM((tile_o, tile_i), acc_dtype)]

        flat = pl.pallas_call(
            functools.partial(_pool_kernel_3d, agg=agg, r_total=r,
                              tile_r=tile_r, need_mask=need_mask,
                              single_r=single_r),
            out_shape=jax.ShapeDtypeStruct((outer, inner), x.dtype),
            grid_spec=pltpu.PrefetchScalarGridSpec(
                num_scalar_prefetch=0,
                grid=(n_o, n_i, n_r),
                in_specs=[pl.BlockSpec((tile_o, tile_r, tile_i),
                                       lambda o, i, k: (o, k, i))],
                out_specs=pl.BlockSpec((tile_o, tile_i),
                                       lambda o, i, k: (o, i)),
                scratch_shapes=scratch,
            ),
            compiler_params=pltpu.CompilerParams(
                dimension_semantics=("parallel", "parallel", "arbitrary"),
                vmem_limit_bytes=vmem_limit),
        )(x3)

    out_shape = pre_shape + ((1,) if keepdim else ()) + post_shape
    return flat.reshape(out_shape)


# --------------------------------------------------------------------------
# Test harness
# --------------------------------------------------------------------------
if __name__ == "__main__":
    def run_case(x, dim, agg, keepdim, tol=1e-5, **kw):
        out = jax.block_until_ready(
            global_pooling(x, dim=dim, agg=agg, keepdim=keepdim, **kw))
        if agg == "max":
            ref = jnp.max(x, axis=dim, keepdims=keepdim)
        else:
            ref = jnp.mean(x, axis=dim, keepdims=keepdim)
        if out.shape != ref.shape or out.dtype != ref.dtype:
            return False
        out_f = np.asarray(jnp.asarray(out, jnp.float32))
        ref_f = np.asarray(jnp.asarray(ref, jnp.float32))
        return bool(np.allclose(out_f, ref_f, rtol=tol, atol=tol))

    key = jax.random.PRNGKey(0)
    # Small 3D-UNet-like activation: (batch, channels, depth, height, width)
    x = jax.random.normal(key, (2, 4, 8, 16, 16), dtype=jnp.float32)

    ok = True
    for dim, agg, keepdim in [(1, "max", False), (1, "mean", True),
                              (2, "max", True), (2, "mean", False),
                              (-1, "max", False), (-1, "mean", True)]:
        ok &= run_case(x, dim, agg, keepdim)

    # Ragged / R-tiled cases: force small blocks so the R reduction axis is
    # split across grid steps (exercises accumulator + last-step mask paths).
    y = jax.random.normal(jax.random.PRNGKey(0), (2, 3, 9, 5, 144),
                          dtype=jnp.float32)
    for agg in ("max", "mean"):
        ok &= run_case(y, 2, agg, False, target_block_bytes=8 * 1024)

    z = jax.random.normal(jax.random.PRNGKey(0), (4, 300), dtype=jnp.float32)
    for agg in ("max", "mean"):
        ok &= run_case(z, -1, agg, True, target_block_bytes=4 * 1024)

    # Native-dtype max paths (no f32 upcast): bf16 and int32 (exact compare).
    w = jax.random.normal(jax.random.PRNGKey(1), (2, 4, 8, 16, 16),
                          dtype=jnp.bfloat16)
    ok &= run_case(w, 1, "max", False, tol=0.0)
    v = jax.random.randint(jax.random.PRNGKey(2), (3, 7, 130), -1000, 1000,
                           dtype=jnp.int32)
    ok &= run_case(v, 1, "max", True, tol=0.0)

    print("KERNEL_OK" if ok else "KERNEL_MISMATCH")
</pallas_src>

<mosaic_0001>
module attributes {stable_mosaic.version = 11 : i64} {
  func.func @_pool_kernel_3d(%arg0: i32, %arg1: i32, %arg2: i32, %arg3: memref<2x4x2048xf32, #tpu.memory_space<vmem>>, %arg4: memref<2x2048xf32, #tpu.memory_space<vmem>>) attributes {dimension_semantics = [#tpu.dimension_semantics<parallel>, #tpu.dimension_semantics<parallel>, #tpu.dimension_semantics<arbitrary>], iteration_bounds = array<i64: 1, 1, 1>, scalar_prefetch = 0 : i64, scratch_operands = 0 : i64, tpu.core_type = #tpu.core_type<tc>, window_params = [{transform_indices = @transform_0, window_bounds = array<i64: 2, 4, 2048>}, {transform_indices = @transform_1, window_bounds = array<i64: 2, 2048>}]} {
    %c0 = arith.constant 0 : index
    %c0_0 = arith.constant 0 : index
    %c0_1 = arith.constant 0 : index
    %0 = vector.load %arg3[%c0, %c0_0, %c0_1] : memref<2x4x2048xf32, #tpu.memory_space<vmem>>, vector<2x4x2048xf32>
    %cst = arith.constant dense<0xFF800000> : vector<2x2048xf32>
    %1 = vector.multi_reduction <maximumf>, %0, %cst [1] : vector<2x4x2048xf32> to vector<2x2048xf32>
    %c0_2 = arith.constant 0 : index
    %c0_3 = arith.constant 0 : index
    %2 = vector.load %arg4[%c0_2, %c0_3] : memref<2x2048xf32, #tpu.memory_space<vmem>>, vector<2x2048xf32>
    tpu.vector_store %arg4[%c0_2, %c0_3], %1 {strides = array<i32>} : memref<2x2048xf32, #tpu.memory_space<vmem>>, vector<2x2048xf32>,
    return
  }
  func.func @transform_0(%arg0: i32, %arg1: i32, %arg2: i32) -> (i32, i32, i32) {
    %c0_i32 = arith.constant 0 : i32
    return %arg0, %arg2, %arg1 : i32, i32, i32
  }
  func.func @transform_1(%arg0: i32, %arg1: i32, %arg2: i32) -> (i32, i32) {
    %c0_i32 = arith.constant 0 : i32
    return %arg0, %arg1 : i32, i32
  }
}

</mosaic_0001>

<llo_original>
// kernel: tpu_custom_call.1
$region0: #{tpu_custom_call.1}
  #allocation0 [shape = 'u32[]', space=smem, size = 0x4, offset = 0x4, fixed_abs, tag = 'smem constant byte address 0x4 - core index']
  #allocation1 [shape = 'u32[144,128]{1,0:T(1,128)}', space=vmem, size = 0x12000, scoped, tag = 'internal scratch']
  %s0 = inlined_call_operand.hbm [shape: f32[2,4,2048], index: 0, kind: input, shape index: {}]
  %s1 = inlined_call_operand.hbm [shape: f32[2,2048], index: 1, kind: output, shape index: {}]
  %s2 = sld [smem:[#allocation0]]
  $region18: #{tpu_custom_call.1} parent=0
    _
  %s4 = ssub.s32 1, %s2
  %s5 = scalar_select 0, %s4, %s2
  $region1: #{tpu_custom_call.1} parent=0
    #allocation2 [shape = 'u8[65536]{0}', space=vmem, size = 0x10000, scoped, tag = 'input window, operand 0, single buffered']
    #allocation3 [shape = 's32[1]{0}', space=sflag, size = 0x4, scoped, tag = 'scoped memory for tpu_custom_call.1']
    #allocation4 [shape = 's32[1]{0}', space=sflag, size = 0x4, scoped, tag = 'scoped memory for tpu_custom_call.1']
    #allocation5 [shape = 'u8[16384]{0}', space=vmem, size = 0x4000, scoped, tag = 'output window, operand 0, single buffered']
    %6 = vsyncpa [#allocation3], 0
    %7 = vsyncpa [#allocation4], 0
    // Predicated region
    $region2: #{tpu_custom_call.1} parent=1 // pred_check
      _
    $region3: #{tpu_custom_call.1} parent=1 // pred_check_branch
      %9 = sbr.rel (0) target = $region5
    $region4: #{tpu_custom_call.1} parent=1 // pred_region
      %s11 = ssub.s32 2048, 2048
      %12 = vsyncadd [#allocation3], %s11
      %s13 = sshll.u32 [#allocation2], 4
      %s14 = int_to_ptr.vmem [resolvable:$true] %s13
      %19 = dma.hbm_to_vmem [thread:$0]  %s0, 2048, %s14, [#allocation3], 1024, 1024, 64
    $region5: #{tpu_custom_call.1} parent=1 // pred_fallthru
      _
    // Predicated region
    $region6: #{tpu_custom_call.1} parent=1 // pred_check
      _
    $region7: #{tpu_custom_call.1} parent=1 // pred_check_branch
      %21 = sbr.rel (0) target = $region9
    $region8: #{tpu_custom_call.1} parent=1 // pred_region
      %22 = dma.done [#allocation3], 2048
    $region9: #{tpu_custom_call.1} parent=1 // pred_fallthru
      _
    %v23 = vld [vmem:[#allocation2] sm:$0xff]
    %v24 = vld [vmem:[#allocation2 + $0x8] sm:$0xff]
    %v25 = vld [vmem:[#allocation2 + $0x10] sm:$0xff]
    %v26 = vld [vmem:[#allocation2 + $0x18] sm:$0xff]
    %v27 = vld [vmem:[#allocation2 + $0x20] sm:$0xff]
    %v28 = vld [vmem:[#allocation2 + $0x28] sm:$0xff]
    %v29 = vld [vmem:[#allocation2 + $0x30] sm:$0xff]
    %v30 = vld [vmem:[#allocation2 + $0x38] sm:$0xff]
    %v31 = vld [vmem:[#allocation2 + $0x40] sm:$0xff]
    %v32 = vld [vmem:[#allocation2 + $0x48] sm:$0xff]
    %v33 = vld [vmem:[#allocation2 + $0x50] sm:$0xff]
    %v34 = vld [vmem:[#allocation2 + $0x58] sm:$0xff]
    %v35 = vld [vmem:[#allocation2 + $0x60] sm:$0xff]
    %v36 = vld [vmem:[#allocation2 + $0x68] sm:$0xff]
    %v37 = vld [vmem:[#allocation2 + $0x70] sm:$0xff]
    %v38 = vld [vmem:[#allocation2 + $0x78] sm:$0xff]
    %v55 = vcombine.high %v23, %v23
    %v56 = vcombine.high %v24, %v24
    %v57 = vcombine.high %v25, %v25
    %v58 = vcombine.high %v26, %v26
    %v59 = vcombine.high %v27, %v27
    %v60 = vcombine.high %v28, %v28
    %v61 = vcombine.high %v29, %v29
    %v62 = vcombine.high %v30, %v30
    %v63 = vcombine.high %v31, %v31
    %v64 = vcombine.high %v32, %v32
    %v65 = vcombine.high %v33, %v33
    %v66 = vcombine.high %v34, %v34
    %v67 = vcombine.high %v35, %v35
    %v68 = vcombine.high %v36, %v36
    %v69 = vcombine.high %v37, %v37
    %v70 = vcombine.high %v38, %v38
    %vm87 = vcmask 1043456
    %v88 = vsel %vm87, %v23, -inf
    %v89 = vrot.slane %v88, 4
    %v90 = vmax.f32 %v88, %v89
    %v91 = vrot.slane %v90, 2
    %v92 = vmax.f32 %v90, %v91
    %v93 = vrot.slane %v92, 1
    %v94 = vmax.f32 %v92, %v93
    %v95 = vsel %vm87, %v55, -inf
    %v96 = vrot.slane %v95, 4
    %v97 = vmax.f32 %v95, %v96
    %v98 = vrot.slane %v97, 2
    %v99 = vmax.f32 %v97, %v98
    %v100 = vrot.slane %v99, 1
    %v101 = vmax.f32 %v99, %v100
    %v102 = vsel %vm87, %v24, -inf
    %v103 = vrot.slane %v102, 4
    %v104 = vmax.f32 %v102, %v103
    %v105 = vrot.slane %v104, 2
    %v106 = vmax.f32 %v104, %v105
    %v107 = vrot.slane %v106, 1
    %v108 = vmax.f32 %v106, %v107
    %v109 = vsel %vm87, %v56, -inf
    %v110 = vrot.slane %v109, 4
    %v111 = vmax.f32 %v109, %v110
    %v112 = vrot.slane %v111, 2
    %v113 = vmax.f32 %v111, %v112
    %v114 = vrot.slane %v113, 1
    %v115 = vmax.f32 %v113, %v114
    %v116 = vsel %vm87, %v25, -inf
    %v117 = vrot.slane %v116, 4
    %v118 = vmax.f32 %v116, %v117
    %v119 = vrot.slane %v118, 2
    %v120 = vmax.f32 %v118, %v119
    %v121 = vrot.slane %v120, 1
    %v122 = vmax.f32 %v120, %v121
    %v123 = vsel %vm87, %v57, -inf
    %v124 = vrot.slane %v123, 4
    %v125 = vmax.f32 %v123, %v124
    %v126 = vrot.slane %v125, 2
    %v127 = vmax.f32 %v125, %v126
    %v128 = vrot.slane %v127, 1
    %v129 = vmax.f32 %v127, %v128
    %v130 = vsel %vm87, %v26, -inf
    %v131 = vrot.slane %v130, 4
    %v132 = vmax.f32 %v130, %v131
    %v133 = vrot.slane %v132, 2
    %v134 = vmax.f32 %v132, %v133
    %v135 = vrot.slane %v134, 1
    %v136 = vmax.f32 %v134, %v135
    %v137 = vsel %vm87, %v58, -inf
    %v138 = vrot.slane %v137, 4
    %v139 = vmax.f32 %v137, %v138
    %v140 = vrot.slane %v139, 2
    %v141 = vmax.f32 %v139, %v140
    %v142 = vrot.slane %v141, 1
    %v143 = vmax.f32 %v141, %v142
    %v144 = vsel %vm87, %v27, -inf
    %v145 = vrot.slane %v144, 4
    %v146 = vmax.f32 %v144, %v145
    %v147 = vrot.slane %v146, 2
    %v148 = vmax.f32 %v146, %v147
    %v149 = vrot.slane %v148, 1
    %v150 = vmax.f32 %v148, %v149
    %v151 = vsel %vm87, %v59, -inf
    %v152 = vrot.slane %v151, 4
    %v153 = vmax.f32 %v151, %v152
    %v154 = vrot.slane %v153, 2
    %v155 = vmax.f32 %v153, %v154
    %v156 = vrot.slane %v155, 1
    %v157 = vmax.f32 %v155, %v156
    %v158 = vsel %vm87, %v28, -inf
    %v159 = vrot.slane %v158, 4
    %v160 = vmax.f32 %v158, %v159
    %v161 = vrot.slane %v160, 2
    %v162 = vmax.f32 %v160, %v161
    %v163 = vrot.slane %v162, 1
    %v164 = vmax.f32 %v162, %v163
    %v165 = vsel %vm87, %v60, -inf
    %v166 = vrot.slane %v165, 4
    %v167 = vmax.f32 %v165, %v166
    %v168 = vrot.slane %v167, 2
    %v169 = vmax.f32 %v167, %v168
    %v170 = vrot.slane %v169, 1
    %v171 = vmax.f32 %v169, %v170
    %v172 = vsel %vm87, %v29, -inf
    %v173 = vrot.slane %v172, 4
    %v174 = vmax.f32 %v172, %v173
    %v175 = vrot.slane %v174, 2
    %v176 = vmax.f32 %v174, %v175
    %v177 = vrot.slane %v176, 1
    %v178 = vmax.f32 %v176, %v177
    %v179 = vsel %vm87, %v61, -inf
    %v180 = vrot.slane %v179, 4
    %v181 = vmax.f32 %v179, %v180
    %v182 = vrot.slane %v181, 2
    %v183 = vmax.f32 %v181, %v182
    %v184 = vrot.slane %v183, 1
    %v185 = vmax.f32 %v183, %v184
    %v186 = vsel %vm87, %v30, -inf
    %v187 = vrot.slane %v186, 4
    %v188 = vmax.f32 %v186, %v187
    %v189 = vrot.slane %v188, 2
    %v190 = vmax.f32 %v188, %v189
    %v191 = vrot.slane %v190, 1
    %v192 = vmax.f32 %v190, %v191
    %v193 = vsel %vm87, %v62, -inf
    %v194 = vrot.slane %v193, 4
    %v195 = vmax.f32 %v193, %v194
    %v196 = vrot.slane %v195, 2
    %v197 = vmax.f32 %v195, %v196
    %v198 = vrot.slane %v197, 1
    %v199 = vmax.f32 %v197, %v198
    %v200 = vsel %vm87, %v31, -inf
    %v201 = vrot.slane %v200, 4
    %v202 = vmax.f32 %v200, %v201
    %v203 = vrot.slane %v202, 2
    %v204 = vmax.f32 %v202, %v203
    %v205 = vrot.slane %v204, 1
    %v206 = vmax.f32 %v204, %v205
    %v207 = vsel %vm87, %v63, -inf
    %v208 = vrot.slane %v207, 4
    %v209 = vmax.f32 %v207, %v208
    %v210 = vrot.slane %v209, 2
    %v211 = vmax.f32 %v209, %v210
    %v212 = vrot.slane %v211, 1
    %v213 = vmax.f32 %v211, %v212
    %v214 = vsel %vm87, %v32, -inf
    %v215 = vrot.slane %v214, 4
    %v216 = vmax.f32 %v214, %v215
    %v217 = vrot.slane %v216, 2
    %v218 = vmax.f32 %v216, %v217
    %v219 = vrot.slane %v218, 1
    %v220 = vmax.f32 %v218, %v219
    %v221 = vsel %vm87, %v64, -inf
    %v222 = vrot.slane %v221, 4
    %v223 = vmax.f32 %v221, %v222
    %v224 = vrot.slane %v223, 2
    %v225 = vmax.f32 %v223, %v224
    %v226 = vrot.slane %v225, 1
    %v227 = vmax.f32 %v225, %v226
    %v228 = vsel %vm87, %v33, -inf
    %v229 = vrot.slane %v228, 4
    %v230 = vmax.f32 %v228, %v229
    %v231 = vrot.slane %v230, 2
    %v232 = vmax.f32 %v230, %v231
    %v233 = vrot.slane %v232, 1
    %v234 = vmax.f32 %v232, %v233
    %v235 = vsel %vm87, %v65, -inf
    %v236 = vrot.slane %v235, 4
    %v237 = vmax.f32 %v235, %v236
    %v238 = vrot.slane %v237, 2
    %v239 = vmax.f32 %v237, %v238
    %v240 = vrot.slane %v239, 1
    %v241 = vmax.f32 %v239, %v240
    %v242 = vsel %vm87, %v34, -inf
    %v243 = vrot.slane %v242, 4
    %v244 = vmax.f32 %v242, %v243
    %v245 = vrot.slane %v244, 2
    %v246 = vmax.f32 %v244, %v245
    %v247 = vrot.slane %v246, 1
    %v248 = vmax.f32 %v246, %v247
    %v249 = vsel %vm87, %v66, -inf
    %v250 = vrot.slane %v249, 4
    %v251 = vmax.f32 %v249, %v250
    %v252 = vrot.slane %v251, 2
    %v253 = vmax.f32 %v251, %v252
    %v254 = vrot.slane %v253, 1
    %v255 = vmax.f32 %v253, %v254
    %v256 = vsel %vm87, %v35, -inf
    %v257 = vrot.slane %v256, 4
    %v258 = vmax.f32 %v256, %v257
    %v259 = vrot.slane %v258, 2
    %v260 = vmax.f32 %v258, %v259
    %v261 = vrot.slane %v260, 1
    %v262 = vmax.f32 %v260, %v261
    %v263 = vsel %vm87, %v67, -inf
    %v264 = vrot.slane %v263, 4
    %v265 = vmax.f32 %v263, %v264
    %v266 = vrot.slane %v265, 2
    %v267 = vmax.f32 %v265, %v266
    %v268 = vrot.slane %v267, 1
    %v269 = vmax.f32 %v267, %v268
    %v270 = vsel %vm87, %v36, -inf
    %v271 = vrot.slane %v270, 4
    %v272 = vmax.f32 %v270, %v271
    %v273 = vrot.slane %v272, 2
    %v274 = vmax.f32 %v272, %v273
    %v275 = vrot.slane %v274, 1
    %v276 = vmax.f32 %v274, %v275
    %v277 = vsel %vm87, %v68, -inf
    %v278 = vrot.slane %v277, 4
    %v279 = vmax.f32 %v277, %v278
    %v280 = vrot.slane %v279, 2
    %v281 = vmax.f32 %v279, %v280
    %v282 = vrot.slane %v281, 1
    %v283 = vmax.f32 %v281, %v282
    %v284 = vsel %vm87, %v37, -inf
    %v285 = vrot.slane %v284, 4
    %v286 = vmax.f32 %v284, %v285
    %v287 = vrot.slane %v286, 2
    %v288 = vmax.f32 %v286, %v287
    %v289 = vrot.slane %v288, 1
    %v290 = vmax.f32 %v288, %v289
    %v291 = vsel %vm87, %v69, -inf
    %v292 = vrot.slane %v291, 4
    %v293 = vmax.f32 %v291, %v292
    %v294 = vrot.slane %v293, 2
    %v295 = vmax.f32 %v293, %v294
    %v296 = vrot.slane %v295, 1
    %v297 = vmax.f32 %v295, %v296
    %v298 = vsel %vm87, %v38, -inf
    %v299 = vrot.slane %v298, 4
    %v300 = vmax.f32 %v298, %v299
    %v301 = vrot.slane %v300, 2
    %v302 = vmax.f32 %v300, %v301
    %v303 = vrot.slane %v302, 1
    %v304 = vmax.f32 %v302, %v303
    %v305 = vsel %vm87, %v70, -inf
    %v306 = vrot.slane %v305, 4
    %v307 = vmax.f32 %v305, %v306
    %v308 = vrot.slane %v307, 2
    %v309 = vmax.f32 %v307, %v308
    %v310 = vrot.slane %v309, 1
    %v311 = vmax.f32 %v309, %v310
    %v344 = vcombine.low %v94, %v101
    %v345 = vcombine.low %v108, %v115
    %v347 = vunpack.c.l.s4 1983009808
    %v348 = vunpack.c.0.s8 %v347
    %v349 = vlaneseq
    %v350 = vshrl.u32 %v349, 7
    %v351 = vsub.s32 %v348, %v350
    %v352 = vrot.slane %v344, %v351
    %v354 = vunpack.c.l.s4 1983009808
    %v355 = vunpack.c.0.s8 %v354
    %v356 = vlaneseq
    %v357 = vshrl.u32 %v356, 7
    %v358 = vsub.s32 %v355, %v357
    %v359 = vrot.slane %v345, %v358
    %v360 = vcombine.low %v352, %v359
    %v361 = vcombine.low %v122, %v129
    %v362 = vcombine.low %v136, %v143
    %v364 = vunpack.c.l.s4 1983009808
    %v365 = vunpack.c.0.s8 %v364
    %v366 = vlaneseq
    %v367 = vshrl.u32 %v366, 7
    %v368 = vsub.s32 %v365, %v367
    %v369 = vrot.slane %v361, %v368
    %v371 = vunpack.c.l.s4 1983009808
    %v372 = vunpack.c.0.s8 %v371
    %v373 = vlaneseq
    %v374 = vshrl.u32 %v373, 7
    %v375 = vsub.s32 %v372, %v374
    %v376 = vrot.slane %v362, %v375
    %v377 = vcombine.low %v369, %v376
    %v378 = vcombine.low %v150, %v157
    %v379 = vcombine.low %v164, %v171
    %v381 = vunpack.c.l.s4 1983009808
    %v382 = vunpack.c.0.s8 %v381
    %v383 = vlaneseq
    %v384 = vshrl.u32 %v383, 7
    %v385 = vsub.s32 %v382, %v384
    %v386 = vrot.slane %v378, %v385
    %v388 = vunpack.c.l.s4 1983009808
    %v389 = vunpack.c.0.s8 %v388
    %v390 = vlaneseq
    %v391 = vshrl.u32 %v390, 7
    %v392 = vsub.s32 %v389, %v391
    %v393 = vrot.slane %v379, %v392
    %v394 = vcombine.low %v386, %v393
    %v395 = vcombine.low %v178, %v185
    %v396 = vcombine.low %v192, %v199
    %v398 = vunpack.c.l.s4 1983009808
    %v399 = vunpack.c.0.s8 %v398
    %v400 = vlaneseq
    %v401 = vshrl.u32 %v400, 7
    %v402 = vsub.s32 %v399, %v401
    %v403 = vrot.slane %v395, %v402
    %v405 = vunpack.c.l.s4 1983009808
    %v406 = vunpack.c.0.s8 %v405
    %v407 = vlaneseq
    %v408 = vshrl.u32 %v407, 7
    %v409 = vsub.s32 %v406, %v408
    %v410 = vrot.slane %v396, %v409
    %v411 = vcombine.low %v403, %v410
    %v412 = vcombine.low %v206, %v213
    %v413 = vcombine.low %v220, %v227
    %v415 = vunpack.c.l.s4 1983009808
    %v416 = vunpack.c.0.s8 %v415
    %v417 = vlaneseq
    %v418 = vshrl.u32 %v417, 7
    %v419 = vsub.s32 %v416, %v418
    %v420 = vrot.slane %v412, %v419
    %v422 = vunpack.c.l.s4 1983009808
    %v423 = vunpack.c.0.s8 %v422
    %v424 = vlaneseq
    %v425 = vshrl.u32 %v424, 7
    %v426 = vsub.s32 %v423, %v425
    %v427 = vrot.slane %v413, %v426
    %v428 = vcombine.low %v420, %v427
    %v429 = vcombine.low %v234, %v241
    %v430 = vcombine.low %v248, %v255
    %v432 = vunpack.c.l.s4 1983009808
    %v433 = vunpack.c.0.s8 %v432
    %v434 = vlaneseq
    %v435 = vshrl.u32 %v434, 7
    %v436 = vsub.s32 %v433, %v435
    %v437 = vrot.slane %v429, %v436
    %v439 = vunpack.c.l.s4 1983009808
    %v440 = vunpack.c.0.s8 %v439
    %v441 = vlaneseq
    %v442 = vshrl.u32 %v441, 7
    %v443 = vsub.s32 %v440, %v442
    %v444 = vrot.slane %v430, %v443
    %v445 = vcombine.low %v437, %v444
    %v446 = vcombine.low %v262, %v269
    %v447 = vcombine.low %v276, %v283
    %v449 = vunpack.c.l.s4 1983009808
    %v450 = vunpack.c.0.s8 %v449
    %v451 = vlaneseq
    %v452 = vshrl.u32 %v451, 7
    %v453 = vsub.s32 %v450, %v452
    %v454 = vrot.slane %v446, %v453
    %v456 = vunpack.c.l.s4 1983009808
    %v457 = vunpack.c.0.s8 %v456
    %v458 = vlaneseq
    %v459 = vshrl.u32 %v458, 7
    %v460 = vsub.s32 %v457, %v459
    %v461 = vrot.slane %v447, %v460
    %v462 = vcombine.low %v454, %v461
    %v463 = vcombine.low %v290, %v297
    %v464 = vcombine.low %v304, %v311
    %v466 = vunpack.c.l.s4 1983009808
    %v467 = vunpack.c.0.s8 %v466
    %v468 = vlaneseq
    %v469 = vshrl.u32 %v468, 7
    %v470 = vsub.s32 %v467, %v469
    %v471 = vrot.slane %v463, %v470
    %v473 = vunpack.c.l.s4 1983009808
    %v474 = vunpack.c.0.s8 %v473
    %v475 = vlaneseq
    %v476 = vshrl.u32 %v475, 7
    %v477 = vsub.s32 %v474, %v476
    %v478 = vrot.slane %v464, %v477
    %v479 = vcombine.low %v471, %v478
    %vm480 = vcmask 1044484
    %v481 = vsel %vm480, %v360, %v360
    %vm482 = vcmask 1046534
    %v483 = vsel %vm482, %v360, %v481
    %v484 = vrot.slane %v428, 7
    %vm485 = vcmask 1041409
    %v486 = vsel %vm485, %v484, %v483
    %vm487 = vcmask 1043459
    %v488 = vsel %vm487, %v484, %v486
    %vm489 = vcmask 1045509
    %v490 = vsel %vm489, %v484, %v488
    %vm491 = vcmask 1047559
    %v492 = vsel %vm491, %v484, %v490
    %v493 = vsel %vm480, %v377, %v377
    %v494 = vsel %vm482, %v377, %v493
    %v495 = vrot.slane %v445, 7
    %v496 = vsel %vm485, %v495, %v494
    %v497 = vsel %vm487, %v495, %v496
    %v498 = vsel %vm489, %v495, %v497
    %v499 = vsel %vm491, %v495, %v498
    %v500 = vsel %vm480, %v394, %v394
    %v501 = vsel %vm482, %v394, %v500
    %v502 = vrot.slane %v462, 7
    %v503 = vsel %vm485, %v502, %v501
    %v504 = vsel %vm487, %v502, %v503
    %v505 = vsel %vm489, %v502, %v504
    %v506 = vsel %vm491, %v502, %v505
    %v507 = vsel %vm480, %v411, %v411
    %v508 = vsel %vm482, %v411, %v507
    %v509 = vrot.slane %v479, 7
    %v510 = vsel %vm485, %v509, %v508
    %v511 = vsel %vm487, %v509, %v510
    %v512 = vsel %vm489, %v509, %v511
    %v513 = vsel %vm491, %v509, %v512
    %518 = vst [vmem:[#allocation5] sm:$0xff] %v492
    %519 = vst [vmem:[#allocation5 + $0x8] sm:$0xff] %v499
    %520 = vst [vmem:[#allocation5 + $0x10] sm:$0xff] %v506
    %521 = vst [vmem:[#allocation5 + $0x18] sm:$0xff] %v513
    // Predicated region
    $region10: #{tpu_custom_call.1} parent=1 // pred_check
      _
    $region11: #{tpu_custom_call.1} parent=1 // pred_check_branch
      %523 = sbr.rel (0) target = $region13
    $region12: #{tpu_custom_call.1} parent=1 // pred_region
      %s525 = ssub.s32 512, 512
      %526 = vsyncadd [#allocation4], %s525
      %s528 = sshll.u32 [#allocation5], 4
      %s529 = int_to_ptr.vmem [resolvable:$true] %s528
      %531 = dma.vmem_to_hbm [thread:$0]  %s529, 512, %s1, [#allocation4]
    $region13: #{tpu_custom_call.1} parent=1 // pred_fallthru
      _
    // Predicated region
    $region14: #{tpu_custom_call.1} parent=1 // pred_check
      _
    $region15: #{tpu_custom_call.1} parent=1 // pred_check_branch
      %533 = sbr.rel (0) target = $region17
    $region16: #{tpu_custom_call.1} parent=1 // pred_region
      %534 = dma.done [#allocation4], 512
    $region17: #{tpu_custom_call.1} parent=1 // pred_fallthru
      _
    %535 = vsyncpa [#allocation3], 1
    %536 = vsyncpa [#allocation4], 1

</llo_original>
